<compile_context>
chip_gen: v7x
topology: tpu7x:2x2x1
jax: 0.10.0
libtpu: 0.0.40
codegen_flags: <defaults>
</compile_context>

<pallas_src>
import jax
import jax.numpy as jnp
from jax.experimental import pallas as pl
from jax.experimental.pallas import tpu as pltpu


def _make_gconv_kernel(tn):
    """Kernel over one batch tile: out[n] = A^T @ x[n] for n in [0, tn)."""

    def kernel(a_t_ref, x_ref, o_ref):
        # a_t_ref: (W, V)      A^T, VMEM-resident every grid step
        # x_ref  : (tn, V, C)  native-layout batch tile of x
        # o_ref  : (tn, W, C)  native-layout batch tile of the output
        a_t = a_t_ref[...]
        for n in range(tn):  # small static unroll; MXU has huge headroom here
            o_ref[n] = jnp.dot(
                a_t, x_ref[n], preferred_element_type=jnp.float32
            ).astype(o_ref.dtype)

    return kernel


def _pick_batch_tile(N, V, C, itemsize, batch_tile):
    if batch_tile is not None:
        return max(1, min(int(batch_tile), N))
    per_batch_bytes = max(1, V * C * itemsize)
    # ~1 MiB x-tiles amortize per-grid-step overhead and saturate HBM.
    tn = max(1, (1 << 20) // per_batch_bytes)
    tn = min(tn, 32)  # bound the static in-kernel unroll
    # Ensure >=2 (ideally >=4) grid steps so v7x's two TensorCores can share the
    # "parallel" batch axis (no effect on single-TC v5e/v6e).
    if N >= 4:
        tn = min(tn, max(1, N // 4))
    elif N >= 2:
        tn = min(tn, max(1, N // 2))
    return max(1, min(tn, N))


def gconv_hyper(x, A, *, batch_tile=None, compute_dtype=None, out_dtype=None):
    """out[n, w, c] = sum_v x[n, v, c] * A[v, w]  (== torch.einsum('nvc,vw->nwc')).

    x: (N, V, C), A: (V, W).  Returns (N, W, C) in `out_dtype` (default: x.dtype).
    Pass bf16 x/A (and out_dtype=bf16) to halve HBM traffic on all TPU generations.
    """
    N, V, C = x.shape
    Va, W = A.shape
    assert Va == V, "A first dim must match x node dim"

    orig_dtype = x.dtype
    if compute_dtype is not None and x.dtype != jnp.dtype(compute_dtype):
        # NOTE: this cast is an extra HBM pass; prefer feeding data already in
        # the compute dtype on memory-bound call sites.
        x = x.astype(compute_dtype)
    A = A.astype(x.dtype)  # tiny; MXU wants matching operand dtypes
    if out_dtype is None:
        out_dtype = orig_dtype

    x_item = jnp.dtype(x.dtype).itemsize
    o_item = jnp.dtype(out_dtype).itemsize

    tn = _pick_batch_tile(N, V, C, x_item, batch_tile)
    gn = pl.cdiv(N, tn)

    # A^T once in the wrapper: only V*W elements, negligible next to x/out
    # traffic, and keeps the in-kernel matmul in vanilla (W,V)@(V,C) form.
    a_t = jnp.transpose(A)

    # Exact double-buffered VMEM requirement; raise the scoped limit only if we
    # exceed the smallest default (v5e, 16 MiB), capped at 48 MiB for v7x.
    vmem_need = 2 * (tn * V * C * x_item + tn * W * C * o_item + V * W * x_item)
    cp_kwargs = dict(dimension_semantics=("parallel",))
    if vmem_need > (16 << 20):
        cp_kwargs["vmem_limit_bytes"] = int(min(vmem_need + (4 << 20), 48 << 20))

    grid_spec = pl.GridSpec(
        grid=(gn,),
        in_specs=[
            pl.BlockSpec((W, V), lambda i: (0, 0)),          # A^T: full, resident
            pl.BlockSpec((tn, V, C), lambda i: (i, 0, 0)),   # native x batch tile
        ],
        out_specs=pl.BlockSpec((tn, W, C), lambda i: (i, 0, 0)),  # native out tile
    )

    return pl.pallas_call(
        _make_gconv_kernel(tn),
        out_shape=jax.ShapeDtypeStruct((N, W, C), out_dtype),
        grid_spec=grid_spec,
        compiler_params=pltpu.CompilerParams(**cp_kwargs),
        cost_estimate=pl.CostEstimate(
            flops=2 * N * V * W * C,
            transcendentals=0,
            bytes_accessed=N * V * C * x_item + V * W * x_item + N * W * C * o_item,
        ),
    )(a_t, x)


if __name__ == "__main__":
    key = jax.random.PRNGKey(0)
    k1, k2, k3, k4, k5, k6 = jax.random.split(key, 6)

    # Test 1: small shapes consistent with the module (batch=2, nodes=16, ch=32).
    N, V, C = 2, 16, 32
    x = jax.random.normal(k1, (N, V, C), dtype=jnp.float32)
    A = jax.random.normal(k2, (V, V), dtype=jnp.float32)
    out = jax.block_until_ready(gconv_hyper(x, A))
    ref = jnp.einsum("nvc,vw->nwc", x, A)
    assert out.shape == ref.shape
    assert jnp.allclose(out, ref, atol=5e-4, rtol=5e-4), "f32 mismatch (small)"

    # Test 2: batch tiling with a partial trailing block (grid=(2,), last block
    # covers 2 of 4) and non-8-aligned node count.
    N2, V2, C2 = 6, 20, 80
    x2 = jax.random.normal(k3, (N2, V2, C2), dtype=jnp.float32)
    A2 = jax.random.normal(k4, (V2, V2), dtype=jnp.float32)
    out2 = jax.block_until_ready(gconv_hyper(x2, A2, batch_tile=4))
    ref2 = jnp.einsum("nvc,vw->nwc", x2, A2)
    assert out2.shape == ref2.shape
    assert jnp.allclose(out2, ref2, atol=5e-4, rtol=5e-4), "f32 mismatch (tiled)"

    # Test 3: bf16 in / bf16 out (pure HBM-bandwidth lever, valid on v5e too);
    # accumulation stays f32 via preferred_element_type.
    x3 = jax.random.normal(k5, (4, 16, 32), dtype=jnp.bfloat16)
    A3 = jax.random.normal(k6, (16, 16), dtype=jnp.bfloat16)
    out3 = jax.block_until_ready(gconv_hyper(x3, A3, out_dtype=jnp.bfloat16))
    ref3 = jnp.einsum(
        "nvc,vw->nwc", x3.astype(jnp.float32), A3.astype(jnp.float32)
    ).astype(jnp.bfloat16)
    assert out3.dtype == jnp.bfloat16
    assert jnp.allclose(
        out3.astype(jnp.float32), ref3.astype(jnp.float32), atol=1e-1, rtol=5e-2
    ), "bf16 mismatch"

    print("KERNEL_OK")
</pallas_src>

<mosaic_0001>
module attributes {stable_mosaic.version = 11 : i64} {
  func.func @kernel(%arg0: i32, %arg1: memref<16x16xf32, #tpu.memory_space<vmem>>, %arg2: memref<1x16x32xf32, #tpu.memory_space<vmem>>, %arg3: memref<1x16x32xf32, #tpu.memory_space<vmem>>) attributes {dimension_semantics = [#tpu.dimension_semantics<parallel>], iteration_bounds = array<i64: 2>, scalar_prefetch = 0 : i64, scratch_operands = 0 : i64, tpu.core_type = #tpu.core_type<tc>, window_params = [{pipeline_mode = #tpu.pipeline_mode<synchronous>, transform_indices = @transform_0, window_bounds = array<i64: 16, 16>}, {transform_indices = @transform_1, window_bounds = array<i64: 1, 16, 32>}, {transform_indices = @transform_2, window_bounds = array<i64: 1, 16, 32>}]} {
    %c0 = arith.constant 0 : index
    %c0_0 = arith.constant 0 : index
    %0 = vector.load %arg1[%c0, %c0_0] : memref<16x16xf32, #tpu.memory_space<vmem>>, vector<16x16xf32>
    %c0_1 = arith.constant 0 : index
    %c0_2 = arith.constant 0 : index
    %c0_3 = arith.constant 0 : index
    %1 = vector.load %arg2[%c0_1, %c0_2, %c0_3] : memref<1x16x32xf32, #tpu.memory_space<vmem>>, vector<1x16x32xf32>
    %2 = vector.shape_cast %1 : vector<1x16x32xf32> to vector<16x32xf32>
    %cst = arith.constant dense<0.000000e+00> : vector<16x32xf32>
    %3 = tpu.matmul %0, %2, %cst {dimension_numbers = #tpu.dot_dimension_numbers<[1], [0], [0], [1], [0, 0, 1, 1], [], []>} : vector<16x16xf32>, vector<16x32xf32>, vector<16x32xf32> -> vector<16x32xf32>
    %c0_4 = arith.constant 0 : index
    %c0_5 = arith.constant 0 : index
    %c0_6 = arith.constant 0 : index
    %4 = vector.load %arg3[%c0_4, %c0_5, %c0_6] : memref<1x16x32xf32, #tpu.memory_space<vmem>>, vector<1x16x32xf32>
    %5 = vector.shape_cast %4 : vector<1x16x32xf32> to vector<16x32xf32>
    %6 = vector.shape_cast %3 : vector<16x32xf32> to vector<1x16x32xf32>
    tpu.vector_store %arg3[%c0_4, %c0_5, %c0_6], %6 {strides = array<i32>} : memref<1x16x32xf32, #tpu.memory_space<vmem>>, vector<1x16x32xf32>,
    return
  }
  func.func @transform_0(%arg0: i32) -> (i32, i32) {
    %c0_i32 = arith.constant 0 : i32
    %c0_i32_0 = arith.constant 0 : i32
    %c0_i32_1 = arith.constant 0 : i32
    return %c0_i32, %c0_i32_0 : i32, i32
  }
  func.func @transform_1(%arg0: i32) -> (i32, i32, i32) {
    %c0_i32 = arith.constant 0 : i32
    %c0_i32_0 = arith.constant 0 : i32
    %c0_i32_1 = arith.constant 0 : i32
    return %arg0, %c0_i32, %c0_i32_0 : i32, i32, i32
  }
  func.func @transform_2(%arg0: i32) -> (i32, i32, i32) {
    %c0_i32 = arith.constant 0 : i32
    %c0_i32_0 = arith.constant 0 : i32
    %c0_i32_1 = arith.constant 0 : i32
    return %arg0, %c0_i32, %c0_i32_0 : i32, i32, i32
  }
}

</mosaic_0001>

<llo_original>
// kernel: tpu_custom_call.1
$region0: #{tpu_custom_call.1}
  #allocation0 [shape = 'u32[]', space=smem, size = 0x4, offset = 0x4, fixed_abs, tag = 'smem constant byte address 0x4 - core index']
  #allocation1 [shape = 'u32[144,128]{1,0:T(1,128)}', space=vmem, size = 0x12000, scoped, tag = 'internal scratch']
  %s0 = inlined_call_operand.hbm [shape: f32[16,16], index: 0, kind: input, shape index: {}]
  %s1 = inlined_call_operand.hbm [shape: f32[2,16,32], index: 1, kind: input, shape index: {}]
  %s2 = inlined_call_operand.hbm [shape: f32[2,16,32], index: 2, kind: output, shape index: {}]
  %s3 = sld [smem:[#allocation0]]
  $region49: #{tpu_custom_call.1} parent=0
    _
  %s5 = ssub.s32 1, %s3
  %s6 = scalar_select 0, %s5, %s3
  $region1: #{tpu_custom_call.1} parent=0
    #allocation2 [shape = 'u8[8192]{0}', space=vmem, size = 0x2000, scoped, tag = 'input window, operand 0, single buffered']
    #allocation3 [shape = 's32[2]{0}', space=sflag, size = 0x8, scoped, tag = 'scoped memory for tpu_custom_call.1']
    #allocation4 [shape = 's32[2]{0}', space=sflag, size = 0x8, scoped, tag = 'scoped memory for tpu_custom_call.1']
    #allocation5 [shape = 'u8[16384]{0}', space=vmem, size = 0x4000, scoped, tag = 'input window, operand 1']
    #allocation6 [shape = 's32[2]{0}', space=sflag, size = 0x8, scoped, tag = 'scoped memory for tpu_custom_call.1']
    #allocation7 [shape = 'u8[16384]{0}', space=vmem, size = 0x4000, scoped, tag = 'output window, operand 0']
    %7 = vsyncpa [#allocation3], 0
    %8 = vsyncpa [#allocation6], 0
    %s9 = scalar_lea.sflag [#allocation6], 1
    %10 = vsyncpa %s9, 0
    %11 = vsyncpa [#allocation4], 0
    %s12 = scalar_lea.sflag [#allocation4], 1
    %13 = vsyncpa %s12, 0
    loop: start=0, step=1, limit=4
    $region2: #{tpu_custom_call.1} parent=1 // loop_pre_header
      _
    $region3: #{tpu_custom_call.1} parent=1 // loop_header
      %s15 = sphi 0, %s19
      %p16 = scmp.ge.s32.totalorder %s15, 4
      %s23 = sphi 0, %s23
      %s25 = sphi 0, %s23
      %s26 = sphi 0, %s25
      %s40 = sphi 0, %s26
      %s46 = sphi 0, %s48
      %s49 = sphi 0, %s46
      %s50 = sphi 0, %s49
      %s66 = sphi 0, %s50
      %s72 = sphi 0, %s74
      %s75 = sphi 0, %s72
      %s76 = sphi 0, %s75
      %s92 = sphi 0, %s76
    $region4: #{tpu_custom_call.1} parent=1 // loop_header_branch
      %18 = sbr.rel (%p16) target = $region8
    $region5: #{tpu_custom_call.1} parent=1 // loop_body
      %s20 = ssub.s32 %s15, 1
      %s21 = ssub.s32 %s15, 2
      %s22 = sadd.s32 %s15, 1
      %s24 = sadd.s32 %s23, 1
      %p27 = scmp.eq.s32.totalorder %s15, 1
      %p28 = scmp.ne.s32.totalorder %s23, %s25
      %p29 = scmp.eq.s32.totalorder %s15, 0
      %p30 = por %p28, %p29
      %p31 = scmp.ne.s32.totalorder %s23, %s25
      %p32 = scmp.eq.s32.totalorder %s20, 1
      %p33 = por %p31, %p32
      %p34 = scmp.ne.s32.totalorder %s25, %s26
      %p35 = scmp.eq.s32.totalorder %s20, 0
      %p36 = por %p34, %p35
      %p37 = scmp.ne.s32.totalorder %s25, %s26
      %p38 = scmp.eq.s32.totalorder %s21, 1
      %p39 = por %p37, %p38
      %p41 = scmp.ne.s32.totalorder %s26, %s40
      %p42 = scmp.eq.s32.totalorder %s21, 0
      %p43 = por %p41, %p42
      %s44 = ssub.s32 %s15, %s22
      %p45 = scmp.eq.s32.totalorder %s44, 0
      %s47 = sadd.s32 %s46, 1
      %s48 = scalar_select %p45, %s46, %s47
      %p51 = pneg %p45
      %p52 = scmp.eq.s32.totalorder %s15, 1
      %p53 = por %p51, %p52
      %p54 = scmp.ne.s32.totalorder %s46, %s49
      %p55 = scmp.eq.s32.totalorder %s15, 0
      %p56 = por %p54, %p55
      %p57 = scmp.ne.s32.totalorder %s46, %s49
      %p58 = scmp.eq.s32.totalorder %s20, 1
      %p59 = por %p57, %p58
      %p60 = scmp.ne.s32.totalorder %s49, %s50
      %p61 = scmp.eq.s32.totalorder %s20, 0
      %p62 = por %p60, %p61
      %p63 = scmp.ne.s32.totalorder %s49, %s50
      %p64 = scmp.eq.s32.totalorder %s21, 1
      %p65 = por %p63, %p64
      %p67 = scmp.ne.s32.totalorder %s50, %s66
      %p68 = scmp.eq.s32.totalorder %s21, 0
      %p69 = por %p67, %p68
      %s70 = ssub.s32 %s15, %s22
      %p71 = scmp.eq.s32.totalorder %s70, 0
      %s73 = sadd.s32 %s72, 1
      %s74 = scalar_select %p71, %s72, %s73
      %p77 = pneg %p71
      %p78 = scmp.eq.s32.totalorder %s15, 1
      %p79 = por %p77, %p78
      %p80 = scmp.ne.s32.totalorder %s72, %s75
      %p81 = scmp.eq.s32.totalorder %s15, 0
      %p82 = por %p80, %p81
      %p83 = scmp.ne.s32.totalorder %s72, %s75
      %p84 = scmp.eq.s32.totalorder %s20, 1
      %p85 = por %p83, %p84
      %p86 = scmp.ne.s32.totalorder %s75, %s76
      %p87 = scmp.eq.s32.totalorder %s20, 0
      %p88 = por %p86, %p87
      %p89 = scmp.ne.s32.totalorder %s75, %s76
      %p90 = scmp.eq.s32.totalorder %s21, 1
      %p91 = por %p89, %p90
      %p93 = scmp.ne.s32.totalorder %s76, %s92
      %p94 = scmp.eq.s32.totalorder %s21, 0
      %p95 = por %p93, %p94
      %p96 = scmp.le.s32.totalorder 1, %s15
      %p97 = scmp.lt.s32.totalorder %s15, 3
      %p98 = pnand %p96, %p97
      %p99 = pneg %p98
      // Predicated region
      $region9: #{tpu_custom_call.1} parent=5 // pred_check
        _
      $region10: #{tpu_custom_call.1} parent=5 // pred_check_branch
        %101 = sbr.rel (%p98) target = $region12
      $region11: #{tpu_custom_call.1} parent=5 // pred_region
        %s102 = ssub.s32 %s15, 1
        // Predicated region
        $region13: #{tpu_custom_call.1} parent=11 // pred_check
          %p103 = pneg %p36
        $region14: #{tpu_custom_call.1} parent=11 // pred_check_branch
          %105 = sbr.rel (%p103) target = $region16
        $region15: #{tpu_custom_call.1} parent=11 // pred_region
          %s107 = ssub.s32 256, 256
          %108 = vsyncadd [#allocation3], %s107
          %s109 = sshll.u32 [#allocation2], 4
          %s110 = int_to_ptr.vmem [resolvable:$true] %s109
          %115 = dma.hbm_to_vmem [thread:$0]  %s0, 256, %s110, [#allocation3], 128, 128, 8
        $region16: #{tpu_custom_call.1} parent=11 // pred_fallthru
          _
      $region12: #{tpu_custom_call.1} parent=5 // pred_fallthru
        _
      %p116 = scmp.lt.s32.totalorder %s15, 2
      // Predicated region
      $region17: #{tpu_custom_call.1} parent=5 // pred_check
        %p117 = pneg %p116
      $region18: #{tpu_custom_call.1} parent=5 // pred_check_branch
        %119 = sbr.rel (%p117) target = $region20
      $region19: #{tpu_custom_call.1} parent=5 // pred_region
        // Predicated region
        $region21: #{tpu_custom_call.1} parent=19 // pred_check
          %p120 = pneg %p56
        $region22: #{tpu_custom_call.1} parent=19 // pred_check_branch
          %122 = sbr.rel (%p120) target = $region24
        $region23: #{tpu_custom_call.1} parent=19 // pred_region
          %s123 = sand.u32 %s46, 1
          %s124 = scalar_lea.sflag [#allocation6], %s123
          %s125 = sand.u32 %s46, 1
          %s126 = smul.addr %s125, 16
          %s127 = scalar_lea.vmem [#allocation5], %s126
          %s129 = ssub.s32 256, 256
          %130 = vsyncadd %s124, %s129
          %s131 = smul.addr %s15, 2
          %s132 = smul.addr %s131, 128
          %s133 = scalar_lea.hbm %s1, %s132
          %s134 = sshll.u32 %s127, 4
          %s135 = int_to_ptr.vmem [resolvable:$true] %s134
          %140 = dma.hbm_to_vmem [thread:$0]  %s133, 256, %s135, %s124, 128, 128, 8
        $region24: #{tpu_custom_call.1} parent=19 // pred_fallthru
          _
      $region20: #{tpu_custom_call.1} parent=5 // pred_fallthru
        _
      %p141 = scmp.le.s32.totalorder 1, %s15
      %p142 = scmp.lt.s32.totalorder %s15, 3
      %p143 = pnand %p141, %p142
      %p144 = pneg %p143
      // Predicated region
      $region25: #{tpu_custom_call.1} parent=5 // pred_check
        _
      $region26: #{tpu_custom_call.1} parent=5 // pred_check_branch
        %146 = sbr.rel (%p143) target = $region28
      $region27: #{tpu_custom_call.1} parent=5 // pred_region
        %s147 = ssub.s32 %s15, 1
        // Predicated region
        $region29: #{tpu_custom_call.1} parent=27 // pred_check
          %p148 = pneg %p36
        $region30: #{tpu_custom_call.1} parent=27 // pred_check_branch
          %150 = sbr.rel (%p148) target = $region32
        $region31: #{tpu_custom_call.1} parent=27 // pred_region
          %151 = dma.done [#allocation3], 256
        $region32: #{tpu_custom_call.1} parent=27 // pred_fallthru
          _
        %s152 = sand.u32 %s49, 1
        %s153 = scalar_lea.sflag [#allocation6], %s152
        %s154 = sand.u32 %s49, 1
        %s155 = smul.addr %s154, 16
        %s156 = scalar_lea.vmem [#allocation5], %s155
        // Predicated region
        $region33: #{tpu_custom_call.1} parent=27 // pred_check
          %p157 = pneg %p62
        $region34: #{tpu_custom_call.1} parent=27 // pred_check_branch
          %159 = sbr.rel (%p157) target = $region36
        $region35: #{tpu_custom_call.1} parent=27 // pred_region
          %160 = dma.done %s153, 256
        $region36: #{tpu_custom_call.1} parent=27 // pred_fallthru
          _
        %p161 = pneg %p36
        %p162 = pneg %p33
        %s163 = sand.u32 %s49, 1
        %s164 = scalar_lea.sflag [#allocation6], %s163
        %s165 = sand.u32 %s49, 1
        %s166 = smul.addr %s165, 16
        %s167 = scalar_lea.vmem [#allocation5], %s166
        %p168 = pneg %p62
        %p169 = pneg %p59
        %p170 = pneg %p88
        %p171 = pneg %p85
        %s172 = sand.u32 %s75, 1
        %s173 = scalar_lea.sflag [#allocation4], %s172
        %s174 = sand.u32 %s75, 1
        %s175 = smul.addr %s174, 16
        %s176 = scalar_lea.vmem [#allocation7], %s175
        %v177 = vld [vmem:[#allocation2] sm:$0xff]
        %v178 = vld [vmem:[#allocation2 + $0x8] sm:$0xff]
        %v179 = vld [vmem:[%s156] sm:$0xff]
        %v180 = vld [vmem:[%s156 + $0x8] sm:$0xff]
        %vm181 = vcmask 130048
        %v183 = vsel %vm181, %v177, 0
        %v186 = vsel %vm181, %v178, 0
        %188 = vmatprep.subr.mxu0 0.0
        %189 = vmatpush1.msra.mxu0 %v179
        %190 = vmatprep.subr.mxu0 0.0
        %191 = vmatpush1.msra.mxu0 %v180
        %192 = vmatprep.subr.mxu0 0.0
        %193 = vmatpush1.msra.mxu0 0.0
        %194 = vmatprep.subr.mxu0 0.0
        %195 = vmatpush1.msra.mxu0 0.0
        %196 = vmatprep.subr.mxu0 0.0
        %197 = vmatpush1.msra.mxu0 0.0
        %198 = vmatprep.subr.mxu0 0.0
        %199 = vmatpush1.msra.mxu0 0.0
        %200 = vmatprep.subr.mxu0 0.0
        %201 = vmatpush1.msra.mxu0 0.0
        %202 = vmatprep.subr.mxu0 0.0
        %203 = vmatpush1.msra.mxu0 0.0
        %204 = vmatprep.subr.mxu0 0.0
        %205 = vmatpush1.msra.mxu0 0.0
        %206 = vmatprep.subr.mxu0 0.0
        %207 = vmatpush1.msra.mxu0 0.0
        %208 = vmatprep.subr.mxu0 0.0
        %209 = vmatpush1.msra.mxu0 0.0
        %210 = vmatprep.subr.mxu0 0.0
        %211 = vmatpush1.msra.mxu0 0.0
        %212 = vmatprep.subr.mxu0 0.0
        %213 = vmatpush1.msra.mxu0 0.0
        %214 = vmatprep.subr.mxu0 0.0
        %215 = vmatpush1.msra.mxu0 0.0
        %216 = vmatprep.subr.mxu0 0.0
        %217 = vmatpush1.msra.mxu0 0.0
        %218 = vmatprep.subr.mxu0 0.0
        %219 = vmatpush1.msra.mxu0 0.0
        %220 = vmatprep.subr.mxu0 0.0
        %221 = vmatpush1.msra.mxu0 0.0
        %222 = vmatprep.subr.mxu0 0.0
        %223 = vmatpush1.msra.mxu0 0.0
        %224 = vmatprep.subr.mxu0 0.0
        %225 = vmatpush1.msra.mxu0 0.0
        %226 = vmatprep.subr.mxu0 0.0
        %227 = vmatpush1.msra.mxu0 0.0
        %228 = vmatprep.subr.mxu0 0.0
        %229 = vmatpush1.msra.mxu0 0.0
        %230 = vmatprep.subr.mxu0 0.0
        %231 = vmatpush1.msra.mxu0 0.0
        %232 = vmatprep.subr.mxu0 0.0
        %233 = vmatpush1.msra.mxu0 0.0
        %234 = vmatprep.subr.mxu0 0.0
        %235 = vmatpush1.msra.mxu0 0.0
        %236 = vmatprep.subr.mxu0 0.0
        %237 = vmatpush1.msra.mxu0 0.0
        %238 = vmatprep.subr.mxu0 0.0
        %239 = vmatpush1.msra.mxu0 0.0
        %240 = vmatprep.subr.mxu0 0.0
        %241 = vmatpush1.msra.mxu0 0.0
        %242 = vmatprep.subr.mxu0 0.0
        %243 = vmatpush1.msra.mxu0 0.0
        %244 = vmatprep.subr.mxu0 0.0
        %245 = vmatpush1.msra.mxu0 0.0
        %246 = vmatprep.subr.mxu0 0.0
        %247 = vmatpush1.msra.mxu0 0.0
        %248 = vmatprep.subr.mxu0 0.0
        %249 = vmatpush1.msra.mxu0 0.0
        %250 = vmatprep.subr.mxu0 0.0
        %251 = vmatpush1.msra.mxu0 0.0
        %252 = vmatprep.mubr.f32.mxu0 0.0
        %253 = vmatmul.mubr.f32.gmra.mrb[0].mxu0 %v183
        %v254 = vpop.f32.mrb[0].mxu0
        %v255 = vadd.f32 0.0, %v254
        %v256 = vpop.f32.mrb[0].mxu0
        %257 = vmatprep.mubr.f32.mxu0 0.0
        %258 = vmatmul.mubr.f32.gmra.mrb[0].mxu0 %v186
        %v259 = vpop.f32.mrb[0].mxu0
        %v260 = vadd.f32 0.0, %v259
        %v261 = vpop.f32.mrb[0].mxu0
        %262 = vdwg.mxu0
        %vm263 = vcmask 261120
        %264 = vst.msk [vmem:[%s176] sm:$0xff] %vm263, %v255
        %265 = vst.msk [vmem:[%s176 + $0x8] sm:$0xff] %vm263, %v260
        %s266 = sand.u32 %s75, 1
        %s267 = scalar_lea.sflag [#allocation4], %s266
        %s268 = sand.u32 %s75, 1
        %s269 = smul.addr %s268, 16
        %s270 = scalar_lea.vmem [#allocation7], %s269
        // Predicated region
        $region37: #{tpu_custom_call.1} parent=27 // pred_check
          %p271 = pneg %p85
        $region38: #{tpu_custom_call.1} parent=27 // pred_check_branch
          %273 = sbr.rel (%p271) target = $region40
        $region39: #{tpu_custom_call.1} parent=27 // pred_region
          %s275 = ssub.s32 256, 256
          %276 = vsyncadd %s267, %s275
          %s277 = smul.addr %s20, 2
          %s278 = smul.addr %s277, 128
          %s279 = scalar_lea.hbm %s2, %s278
          %s280 = sshll.u32 %s270, 4
          %s281 = int_to_ptr.vmem [resolvable:$true] %s280
          %286 = dma.vmem_to_hbm [thread:$0]  %s281, 256, %s279, %s267, 128, 128, 8
        $region40: #{tpu_custom_call.1} parent=27 // pred_fallthru
          _
      $region28: #{tpu_custom_call.1} parent=5 // pred_fallthru
        _
      %p287 = scmp.le.s32.totalorder 2, %s15
      // Predicated region
      $region41: #{tpu_custom_call.1} parent=5 // pred_check
        %p288 = pneg %p287
      $region42: #{tpu_custom_call.1} parent=5 // pred_check_branch
        %290 = sbr.rel (%p288) target = $region44
      $region43: #{tpu_custom_call.1} parent=5 // pred_region
        %s291 = ssub.s32 %s15, 2
        // Predicated region
        $region45: #{tpu_custom_call.1} parent=43 // pred_check
          %p292 = pneg %p91
        $region46: #{tpu_custom_call.1} parent=43 // pred_check_branch
          %294 = sbr.rel (%p292) target = $region48
        $region47: #{tpu_custom_call.1} parent=43 // pred_region
          %s295 = sand.u32 %s76, 1
          %s296 = scalar_lea.sflag [#allocation4], %s295
          %s297 = sand.u32 %s76, 1
          %s298 = smul.addr %s297, 16
          %s299 = scalar_lea.vmem [#allocation7], %s298
          %300 = dma.done %s296, 256
        $region48: #{tpu_custom_call.1} parent=43 // pred_fallthru
          _
      $region44: #{tpu_custom_call.1} parent=5 // pred_fallthru
        _
    $region6: #{tpu_custom_call.1} parent=1 // loop_footer
      %s19 = sadd.s32 1, %s15
    $region7: #{tpu_custom_call.1} parent=1 // loop_footer_branch
      %14 = sbr.rel target = $region3
    $region8: #{tpu_custom_call.1} parent=1 // loop_exit
      _
    %301 = vsyncpa [#allocation3], 1
    %s302 = scalar_lea.sflag [#allocation3], 1
    %303 = vsyncpa %s302, 1
    %304 = vsyncpa [#allocation6], 1
    %s305 = scalar_lea.sflag [#allocation6], 1
    %306 = vsyncpa %s305, 1
    %307 = vsyncpa [#allocation4], 1
    %s308 = scalar_lea.sflag [#allocation4], 1
    %309 = vsyncpa %s308, 1

</llo_original>
